<compile_context>
chip_gen: v5e
topology: v5e:2x2
jax: 0.10.0
libtpu: 0.0.40
codegen_flags: <defaults>
</compile_context>

<pallas_src>
import functools

import jax
import jax.numpy as jnp
from jax.experimental import pallas as pl
from jax.experimental.pallas import tpu as pltpu


def _conv_mlp_kernel(cb_ref, x_ref, wc_ref, w1_ref, b1_ref, w2_ref, b2_ref, out_ref):
    # x_ref block: (tile_rows, g*C*L); each row packs g batch rows.
    x = x_ref[...].astype(jnp.float32)

    # 1x1 Conv1d over channels + ReLU, as one block-diagonal MXU matmul.
    h = jnp.dot(x, wc_ref[...], preferred_element_type=jnp.float32)
    h = jnp.maximum(h + cb_ref[0], 0.0)                        # (tile_rows, g*L)

    # SimpleMLP: fc1 (L -> H) + ReLU, fc2 (H -> L), block-diagonal over g groups.
    h1 = jnp.dot(h, w1_ref[...], preferred_element_type=jnp.float32) + b1_ref[...]
    h1 = jnp.maximum(h1, 0.0)                                  # (tile_rows, g*Hp)
    out = jnp.dot(h1, w2_ref[...], preferred_element_type=jnp.float32) + b2_ref[...]
    out_ref[...] = out.astype(out_ref.dtype)                   # (tile_rows, g*L)


def convolutional_transform(x, conv_w, conv_b, w1, b1, w2, b2, *,
                            vmem_block_budget=16 << 20):
    """Fused ConvolutionalTransform forward.

    x:      (B, C, L)    input
    conv_w: (1, C, 1)    Conv1d(C -> 1, kernel_size=1) weight
    conv_b: (1,)         Conv1d bias
    w1:     (H, L)  b1: (H,)   SimpleMLP.fc1  (Linear(L, H))
    w2:     (L, H)  b2: (L,)   SimpleMLP.fc2  (Linear(H, L))
    returns (B, L)  (in x.dtype; intermediates are f32)
    """
    batch, channels, length = x.shape
    hidden = w1.shape[0]
    itemsize = jnp.dtype(x.dtype).itemsize

    # ---- lane packing: g batch rows per packed row (lane-dense loads/stores) ----
    g = max(1, 128 // length)
    padded_b = pl.cdiv(batch, g) * g
    rows = padded_b // g
    in_w = g * channels * length          # packed input lane width
    out_w = g * length                    # packed output lane width

    # Pad hidden so the intermediate / fc weights are lane-dense too (cheap).
    hp = pl.cdiv(128, g) if g * hidden < 128 else hidden
    hid_w = g * hp

    # ---- input / weight preparation (free row-major reshapes + tiny constants) ----
    x_flat = x.reshape(batch, channels * length)
    if padded_b != batch:
        x_flat = jnp.pad(x_flat, ((0, padded_b - batch), (0, 0)))
    x_packed = x_flat.reshape(rows, in_w)

    cw = conv_w.reshape(channels).astype(jnp.float32)                       # (C,)
    cb = conv_b.reshape(1).astype(jnp.float32)                              # (1,) -> SMEM
    eye_l = jnp.eye(length, dtype=jnp.float32)
    eye_g = jnp.eye(g, dtype=jnp.float32)
    wconv_base = (cw[:, None, None] * eye_l[None, :, :]).reshape(channels * length, length)
    wconv_p = jnp.kron(eye_g, wconv_base)                                   # (g*C*L, g*L)

    w1t_pad = jnp.pad(w1.T.astype(jnp.float32), ((0, 0), (0, hp - hidden)))  # (L, Hp)
    w1_p = jnp.kron(eye_g, w1t_pad)                                          # (g*L, g*Hp)
    b1_p = jnp.tile(jnp.pad(b1.astype(jnp.float32), (0, hp - hidden)), g)[None, :]  # (1, g*Hp)

    w2t_pad = jnp.pad(w2.T.astype(jnp.float32), ((0, hp - hidden), (0, 0)))  # (Hp, L)
    w2_p = jnp.kron(eye_g, w2t_pad)                                          # (g*Hp, g*L)
    b2_p = jnp.tile(b2.astype(jnp.float32), g)[None, :]                      # (1, g*L)

    # ---- batch tiling from a VMEM budget (double-buffered x + out blocks) ----
    bytes_per_row = (in_w + out_w) * itemsize
    tile_cap = max(8, int(vmem_block_budget // (2 * bytes_per_row)) // 8 * 8)
    if rows < 16:
        tile_rows = rows                     # single full block (tiny batch)
    else:
        # At least 2 grid steps so the "parallel" axis can shard across v7x's 2 TCs.
        half = pl.cdiv(pl.cdiv(rows, 2), 8) * 8
        tile_rows = min(tile_cap, half)
    grid = (pl.cdiv(rows, tile_rows),)

    # Explicit scoped-VMEM limit: covers the double-buffered blocks + resident
    # weights with margin; floor 32 MiB (> v5e's 16 MiB default), cap 56 MiB
    # (< v7x's 64 MiB physical VMEM).
    block_bytes = 2 * tile_rows * bytes_per_row
    weight_bytes = 2 * 4 * (in_w * out_w + out_w * hid_w + hid_w * out_w + hid_w + out_w)
    vmem_limit = int(min(56 << 20, max(32 << 20, block_bytes + weight_bytes + (4 << 20))))

    cost = pl.CostEstimate(
        flops=2 * batch * length * (channels + 2 * hidden),
        transcendentals=0,
        bytes_accessed=int(batch * (channels * length + length) * itemsize + weight_bytes // 2),
    )

    smem = pl.BlockSpec(memory_space=pltpu.MemorySpace.SMEM)
    const = lambda i: (0, 0)

    out_packed = pl.pallas_call(
        _conv_mlp_kernel,
        out_shape=jax.ShapeDtypeStruct((rows, out_w), x.dtype),
        grid=grid,
        in_specs=[
            smem,                                                   # conv bias (1,)  -> SMEM
            pl.BlockSpec((tile_rows, in_w), lambda i: (i, 0)),      # packed x tiles
            pl.BlockSpec((in_w, out_w), const),                     # conv weight (resident)
            pl.BlockSpec((out_w, hid_w), const),                    # fc1 W^T    (resident)
            pl.BlockSpec((1, hid_w), const),                        # fc1 bias
            pl.BlockSpec((hid_w, out_w), const),                    # fc2 W^T    (resident)
            pl.BlockSpec((1, out_w), const),                        # fc2 bias
        ],
        out_specs=pl.BlockSpec((tile_rows, out_w), lambda i: (i, 0)),
        compiler_params=pltpu.CompilerParams(
            dimension_semantics=("parallel",),
            vmem_limit_bytes=vmem_limit),
        cost_estimate=cost,
    )(cb, x_packed, wconv_p, w1_p, b1_p, w2_p, b2_p)

    # Free row-major un-pack: (rows, g*L) -> (padded_B, L) -> (B, L).
    return out_packed.reshape(padded_b, length)[:batch]


def reference(x, conv_w, conv_b, w1, b1, w2, b2):
    h = jnp.einsum("bcl,c->bl", x, conv_w.reshape(-1)) + conv_b[0]
    h = jnp.maximum(h, 0.0)
    h1 = jnp.maximum(h @ w1.T + b1, 0.0)
    return h1 @ w2.T + b2


if __name__ == "__main__":
    # Shapes consistent with the module: input_channels=3 (default), spatial
    # length L=16 => fc_out_features=16, SimpleMLP hidden=10, batch=2.
    B, C, L, H = 2, 3, 16, 10

    key = jax.random.PRNGKey(0)
    ks = jax.random.split(key, 8)

    x = jax.random.normal(ks[0], (B, C, L), dtype=jnp.float32)

    # Conv1d(C, 1, kernel_size=1): weight (1, C, 1), bias (1,)
    bc = 1.0 / jnp.sqrt(float(C))
    conv_w = jax.random.uniform(ks[1], (1, C, 1), jnp.float32, -bc, bc)
    conv_b = jax.random.uniform(ks[2], (1,), jnp.float32, -bc, bc)

    # SimpleMLP: fc1 Linear(L, H), fc2 Linear(H, L)
    l1 = 1.0 / jnp.sqrt(float(L))
    w1 = jax.random.uniform(ks[3], (H, L), jnp.float32, -l1, l1)
    b1 = jax.random.uniform(ks[4], (H,), jnp.float32, -l1, l1)
    l2 = 1.0 / jnp.sqrt(float(H))
    w2 = jax.random.uniform(ks[5], (L, H), jnp.float32, -l2, l2)
    b2 = jax.random.uniform(ks[6], (L,), jnp.float32, -l2, l2)

    out = convolutional_transform(x, conv_w, conv_b, w1, b1, w2, b2)
    jax.block_until_ready(out)

    ref = reference(x, conv_w, conv_b, w1, b1, w2, b2)
    assert out.shape == (B, L), out.shape
    assert jnp.allclose(out, ref, atol=1e-5, rtol=1e-5), float(jnp.max(jnp.abs(out - ref)))

    # Extra validation: batch not divisible by the lane-packing factor and large
    # enough to exercise multi-step tiling with a partial tail tile.
    B2 = 300
    x2 = jax.random.normal(ks[7], (B2, C, L), dtype=jnp.float32)
    out2 = convolutional_transform(x2, conv_w, conv_b, w1, b1, w2, b2)
    jax.block_until_ready(out2)
    ref2 = reference(x2, conv_w, conv_b, w1, b1, w2, b2)
    assert out2.shape == (B2, L), out2.shape
    assert jnp.allclose(out2, ref2, atol=1e-5, rtol=1e-5), float(jnp.max(jnp.abs(out2 - ref2)))

    print("KERNEL_OK")
</pallas_src>

<mosaic_0001>
module attributes {stable_mosaic.version = 11 : i64} {
  func.func @_conv_mlp_kernel(%arg0: i32, %arg1: memref<1xf32, #tpu.memory_space<smem>>, %arg2: memref<1x384xf32, #tpu.memory_space<vmem>>, %arg3: memref<384x128xf32, #tpu.memory_space<vmem>>, %arg4: memref<128x128xf32, #tpu.memory_space<vmem>>, %arg5: memref<1x128xf32, #tpu.memory_space<vmem>>, %arg6: memref<128x128xf32, #tpu.memory_space<vmem>>, %arg7: memref<1x128xf32, #tpu.memory_space<vmem>>, %arg8: memref<1x128xf32, #tpu.memory_space<vmem>>) attributes {dimension_semantics = [#tpu.dimension_semantics<parallel>], iteration_bounds = array<i64: 1>, scalar_prefetch = 0 : i64, scratch_operands = 0 : i64, tpu.core_type = #tpu.core_type<tc>, window_params = [{transform_indices = @transform_0, window_bounds = array<i64: 1>}, {transform_indices = @transform_1, window_bounds = array<i64: 1, 384>}, {pipeline_mode = #tpu.pipeline_mode<synchronous>, transform_indices = @transform_2, window_bounds = array<i64: 384, 128>}, {pipeline_mode = #tpu.pipeline_mode<synchronous>, transform_indices = @transform_3, window_bounds = array<i64: 128, 128>}, {pipeline_mode = #tpu.pipeline_mode<synchronous>, transform_indices = @transform_4, window_bounds = array<i64: 1, 128>}, {pipeline_mode = #tpu.pipeline_mode<synchronous>, transform_indices = @transform_5, window_bounds = array<i64: 128, 128>}, {pipeline_mode = #tpu.pipeline_mode<synchronous>, transform_indices = @transform_6, window_bounds = array<i64: 1, 128>}, {transform_indices = @transform_7, window_bounds = array<i64: 1, 128>}]} {
    %c0 = arith.constant 0 : index
    %c0_0 = arith.constant 0 : index
    %0 = vector.load %arg2[%c0, %c0_0] : memref<1x384xf32, #tpu.memory_space<vmem>>, vector<1x384xf32>
    %c0_1 = arith.constant 0 : index
    %c0_2 = arith.constant 0 : index
    %1 = vector.load %arg3[%c0_1, %c0_2] : memref<384x128xf32, #tpu.memory_space<vmem>>, vector<384x128xf32>
    %cst = arith.constant dense<0.000000e+00> : vector<1x128xf32>
    %2 = tpu.matmul %0, %1, %cst {dimension_numbers = #tpu.dot_dimension_numbers<[1], [0], [0], [1], [0, 0, 1, 1], [], []>} : vector<1x384xf32>, vector<384x128xf32>, vector<1x128xf32> -> vector<1x128xf32>
    %c0_3 = arith.constant 0 : index
    %3 = memref.load %arg1[%c0_3] : memref<1xf32, #tpu.memory_space<smem>>
    %4 = vector.broadcast %3 : f32 to vector<1x128xf32>
    %5 = arith.addf %2, %4 : vector<1x128xf32>
    %cst_4 = arith.constant 0.000000e+00 : f32
    %6 = vector.broadcast %cst_4 : f32 to vector<1x128xf32>
    %7 = arith.maximumf %5, %6 : vector<1x128xf32>
    %c0_5 = arith.constant 0 : index
    %c0_6 = arith.constant 0 : index
    %8 = vector.load %arg4[%c0_5, %c0_6] : memref<128x128xf32, #tpu.memory_space<vmem>>, vector<128x128xf32>
    %cst_7 = arith.constant dense<0.000000e+00> : vector<1x128xf32>
    %9 = tpu.matmul %7, %8, %cst_7 {dimension_numbers = #tpu.dot_dimension_numbers<[1], [0], [0], [1], [0, 0, 1, 1], [], []>} : vector<1x128xf32>, vector<128x128xf32>, vector<1x128xf32> -> vector<1x128xf32>
    %c0_8 = arith.constant 0 : index
    %c0_9 = arith.constant 0 : index
    %10 = vector.load %arg5[%c0_8, %c0_9] : memref<1x128xf32, #tpu.memory_space<vmem>>, vector<1x128xf32>
    %11 = arith.addf %9, %10 : vector<1x128xf32>
    %cst_10 = arith.constant 0.000000e+00 : f32
    %12 = vector.broadcast %cst_10 : f32 to vector<1x128xf32>
    %13 = arith.maximumf %11, %12 : vector<1x128xf32>
    %c0_11 = arith.constant 0 : index
    %c0_12 = arith.constant 0 : index
    %14 = vector.load %arg6[%c0_11, %c0_12] : memref<128x128xf32, #tpu.memory_space<vmem>>, vector<128x128xf32>
    %cst_13 = arith.constant dense<0.000000e+00> : vector<1x128xf32>
    %15 = tpu.matmul %13, %14, %cst_13 {dimension_numbers = #tpu.dot_dimension_numbers<[1], [0], [0], [1], [0, 0, 1, 1], [], []>} : vector<1x128xf32>, vector<128x128xf32>, vector<1x128xf32> -> vector<1x128xf32>
    %c0_14 = arith.constant 0 : index
    %c0_15 = arith.constant 0 : index
    %16 = vector.load %arg7[%c0_14, %c0_15] : memref<1x128xf32, #tpu.memory_space<vmem>>, vector<1x128xf32>
    %17 = arith.addf %15, %16 : vector<1x128xf32>
    %c0_16 = arith.constant 0 : index
    %c0_17 = arith.constant 0 : index
    %18 = vector.load %arg8[%c0_16, %c0_17] : memref<1x128xf32, #tpu.memory_space<vmem>>, vector<1x128xf32>
    tpu.vector_store %arg8[%c0_16, %c0_17], %17 {strides = array<i32>} : memref<1x128xf32, #tpu.memory_space<vmem>>, vector<1x128xf32>,
    return
  }
  func.func @transform_0(%arg0: i32) -> i32 {
    %c0_i32 = arith.constant 0 : i32
    %c0_i32_0 = arith.constant 0 : i32
    return %c0_i32 : i32
  }
  func.func @transform_1(%arg0: i32) -> (i32, i32) {
    %c0_i32 = arith.constant 0 : i32
    %c0_i32_0 = arith.constant 0 : i32
    return %arg0, %c0_i32 : i32, i32
  }
  func.func @transform_2(%arg0: i32) -> (i32, i32) {
    %c0_i32 = arith.constant 0 : i32
    %c0_i32_0 = arith.constant 0 : i32
    %c0_i32_1 = arith.constant 0 : i32
    return %c0_i32, %c0_i32_0 : i32, i32
  }
  func.func @transform_3(%arg0: i32) -> (i32, i32) {
    %c0_i32 = arith.constant 0 : i32
    %c0_i32_0 = arith.constant 0 : i32
    %c0_i32_1 = arith.constant 0 : i32
    return %c0_i32, %c0_i32_0 : i32, i32
  }
  func.func @transform_4(%arg0: i32) -> (i32, i32) {
    %c0_i32 = arith.constant 0 : i32
    %c0_i32_0 = arith.constant 0 : i32
    %c0_i32_1 = arith.constant 0 : i32
    return %c0_i32, %c0_i32_0 : i32, i32
  }
  func.func @transform_5(%arg0: i32) -> (i32, i32) {
    %c0_i32 = arith.constant 0 : i32
    %c0_i32_0 = arith.constant 0 : i32
    %c0_i32_1 = arith.constant 0 : i32
    return %c0_i32, %c0_i32_0 : i32, i32
  }
  func.func @transform_6(%arg0: i32) -> (i32, i32) {
    %c0_i32 = arith.constant 0 : i32
    %c0_i32_0 = arith.constant 0 : i32
    %c0_i32_1 = arith.constant 0 : i32
    return %c0_i32, %c0_i32_0 : i32, i32
  }
  func.func @transform_7(%arg0: i32) -> (i32, i32) {
    %c0_i32 = arith.constant 0 : i32
    %c0_i32_0 = arith.constant 0 : i32
    return %arg0, %c0_i32 : i32, i32
  }
}

</mosaic_0001>

<llo_original>
// kernel: tpu_custom_call.1
$region0: #{tpu_custom_call.1}
  #allocation0 [shape = 'u32[]', space=smem, size = 0x4, offset = 0x4, fixed_abs, tag = 'smem constant byte address 0x4 - core index']
  #allocation1 [shape = 'u32[72,128]{1,0:T(1,128)}', space=vmem, size = 0x9000, scoped, tag = 'internal scratch']
  #allocation2 [shape = 'f32[1]{0:T(128)S(6)}', space=smem, size = 0x200, scoped, tag = 'scoped memory for tpu_custom_call.1']
  %s0 = inlined_call_operand.<no memory space> [shape: f32[1], index: 0, kind: input, shape index: {}]
  %s1 = inlined_call_operand.hbm [shape: f32[1,384], index: 1, kind: input, shape index: {}]
  %s2 = inlined_call_operand.hbm [shape: f32[384,128], index: 2, kind: input, shape index: {}]
  %s3 = inlined_call_operand.hbm [shape: f32[128,128], index: 3, kind: input, shape index: {}]
  %s4 = inlined_call_operand.vmem [shape: f32[1,128], index: 4, kind: input, shape index: {}]
  %s5 = inlined_call_operand.hbm [shape: f32[128,128], index: 5, kind: input, shape index: {}]
  %s6 = inlined_call_operand.vmem [shape: f32[1,128], index: 6, kind: input, shape index: {}]
  %s7 = inlined_call_operand.hbm [shape: f32[1,128], index: 7, kind: output, shape index: {}]
  %s8 = sld [smem:[#allocation0]]
  $region54: #{tpu_custom_call.1} parent=0
    _
  %s10 = ssub.s32 1, %s8
  %s11 = scalar_select 0, %s10, %s8
  %12 = sst [smem:[#allocation2]] %s0
  $region1: #{tpu_custom_call.1} parent=0
    #allocation3 [shape = 'u8[1536]{0}', space=vmem, size = 0x800, scoped, tag = 'input window, operand 1, single buffered']
    #allocation4 [shape = 's32[1]{0}', space=sflag, size = 0x4, scoped, tag = 'scoped memory for tpu_custom_call.1']
    #allocation5 [shape = 's32[1]{0}', space=sflag, size = 0x4, scoped, tag = 'scoped memory for tpu_custom_call.1']
    #allocation6 [shape = 'u8[196608]{0}', space=vmem, size = 0x30000, scoped, tag = 'input window, operand 2, single buffered']
    #allocation7 [shape = 's32[1]{0}', space=sflag, size = 0x4, scoped, tag = 'scoped memory for tpu_custom_call.1']
    #allocation8 [shape = 'u8[65536]{0}', space=vmem, size = 0x10000, scoped, tag = 'input window, operand 3, single buffered']
    #allocation9 [shape = 'u8[65536]{0}', space=vmem, size = 0x10000, scoped, tag = 'input window, operand 5, single buffered']
    #allocation10 [shape = 's32[1]{0}', space=sflag, size = 0x4, scoped, tag = 'scoped memory for tpu_custom_call.1']
    #allocation11 [shape = 'u8[512]{0}', space=vmem, size = 0x400, scoped, tag = 'output window, operand 0, single buffered']
    %13 = vsyncpa [#allocation4], 0
    %14 = vsyncpa [#allocation7], 0
    %15 = vsyncpa [#allocation10], 0
    %16 = vsyncpa [#allocation5], 0
    // Predicated region
    $region2: #{tpu_custom_call.1} parent=1 // pred_check
      _
    $region3: #{tpu_custom_call.1} parent=1 // pred_check_branch
      %18 = sbr.rel (0) target = $region5
    $region4: #{tpu_custom_call.1} parent=1 // pred_region
      _
    $region5: #{tpu_custom_call.1} parent=1 // pred_fallthru
      _
    // Predicated region
    $region6: #{tpu_custom_call.1} parent=1 // pred_check
      _
    $region7: #{tpu_custom_call.1} parent=1 // pred_check_branch
      %20 = sbr.rel (0) target = $region9
    $region8: #{tpu_custom_call.1} parent=1 // pred_region
      %22 = vsyncadd [#allocation4], 0
      %s24 = sshll.u32 %s1, 4
      %s25 = int_to_ptr.hbm [resolvable:$true] %s24
      %s26 = sshll.u32 [#allocation3], 4
      %s27 = int_to_ptr.vmem [resolvable:$true] %s26
      %29 = dma.hbm_to_vmem [thread:$0]  %s25, 48, %s27, [#allocation4]
    $region9: #{tpu_custom_call.1} parent=1 // pred_fallthru
      _
    // Predicated region
    $region10: #{tpu_custom_call.1} parent=1 // pred_check
      _
    $region11: #{tpu_custom_call.1} parent=1 // pred_check_branch
      %31 = sbr.rel (0) target = $region13
    $region12: #{tpu_custom_call.1} parent=1 // pred_region
      %33 = vsyncadd [#allocation7], 0
      %s34 = sshll.u32 %s2, 4
      %s35 = int_to_ptr.hbm [resolvable:$true] %s34
      %s36 = sshll.u32 [#allocation6], 4
      %s37 = int_to_ptr.vmem [resolvable:$true] %s36
      %42 = dma.hbm_to_vmem [thread:$0]  %s35, 6144, %s37, [#allocation7], 128, 128, 8
    $region13: #{tpu_custom_call.1} parent=1 // pred_fallthru
      _
    // Predicated region
    $region14: #{tpu_custom_call.1} parent=1 // pred_check
      _
    $region15: #{tpu_custom_call.1} parent=1 // pred_check_branch
      %44 = sbr.rel (0) target = $region17
    $region16: #{tpu_custom_call.1} parent=1 // pred_region
      %46 = vsyncadd [#allocation7], 0
      %s47 = sshll.u32 %s3, 4
      %s48 = int_to_ptr.hbm [resolvable:$true] %s47
      %s49 = sshll.u32 [#allocation8], 4
      %s50 = int_to_ptr.vmem [resolvable:$true] %s49
      %55 = dma.hbm_to_vmem [thread:$0]  %s48, 2048, %s50, [#allocation7], 128, 128, 8
    $region17: #{tpu_custom_call.1} parent=1 // pred_fallthru
      _
    // Predicated region
    $region18: #{tpu_custom_call.1} parent=1 // pred_check
      _
    $region19: #{tpu_custom_call.1} parent=1 // pred_check_branch
      %57 = sbr.rel (0) target = $region21
    $region20: #{tpu_custom_call.1} parent=1 // pred_region
      _
    $region21: #{tpu_custom_call.1} parent=1 // pred_fallthru
      _
    // Predicated region
    $region22: #{tpu_custom_call.1} parent=1 // pred_check
      _
    $region23: #{tpu_custom_call.1} parent=1 // pred_check_branch
      %59 = sbr.rel (0) target = $region25
    $region24: #{tpu_custom_call.1} parent=1 // pred_region
      %61 = vsyncadd [#allocation10], 0
      %s62 = sshll.u32 %s5, 4
      %s63 = int_to_ptr.hbm [resolvable:$true] %s62
      %s64 = sshll.u32 [#allocation9], 4
      %s65 = int_to_ptr.vmem [resolvable:$true] %s64
      %70 = dma.hbm_to_vmem [thread:$0]  %s63, 2048, %s65, [#allocation10], 128, 128, 8
    $region25: #{tpu_custom_call.1} parent=1 // pred_fallthru
      _
    // Predicated region
    $region26: #{tpu_custom_call.1} parent=1 // pred_check
      _
    $region27: #{tpu_custom_call.1} parent=1 // pred_check_branch
      %72 = sbr.rel (0) target = $region29
    $region28: #{tpu_custom_call.1} parent=1 // pred_region
      _
    $region29: #{tpu_custom_call.1} parent=1 // pred_fallthru
      _
    // Predicated region
    $region30: #{tpu_custom_call.1} parent=1 // pred_check
      _
    $region31: #{tpu_custom_call.1} parent=1 // pred_check_branch
      %74 = sbr.rel (0) target = $region33
    $region32: #{tpu_custom_call.1} parent=1 // pred_region
      %76 = dma.done [#allocation4], 48
    $region33: #{tpu_custom_call.1} parent=1 // pred_fallthru
      _
    // Predicated region
    $region34: #{tpu_custom_call.1} parent=1 // pred_check
      _
    $region35: #{tpu_custom_call.1} parent=1 // pred_check_branch
      %78 = sbr.rel (0) target = $region37
    $region36: #{tpu_custom_call.1} parent=1 // pred_region
      %80 = dma.done [#allocation7], 6144
    $region37: #{tpu_custom_call.1} parent=1 // pred_fallthru
      _
    // Predicated region
    $region38: #{tpu_custom_call.1} parent=1 // pred_check
      _
    $region39: #{tpu_custom_call.1} parent=1 // pred_check_branch
      %82 = sbr.rel (0) target = $region41
    $region40: #{tpu_custom_call.1} parent=1 // pred_region
      %84 = dma.done [#allocation7], 2048
    $region41: #{tpu_custom_call.1} parent=1 // pred_fallthru
      _
    // Predicated region
    $region42: #{tpu_custom_call.1} parent=1 // pred_check
      _
    $region43: #{tpu_custom_call.1} parent=1 // pred_check_branch
      %86 = sbr.rel (0) target = $region45
    $region44: #{tpu_custom_call.1} parent=1 // pred_region
      %88 = dma.done [#allocation10], 2048
    $region45: #{tpu_custom_call.1} parent=1 // pred_fallthru
      _
    %v89 = vld [vmem:[#allocation3] sm:$0x7]
    %v90 = vld [vmem:[#allocation6] sm:$0xff]
    %v91 = vld [vmem:[#allocation6 + $0x8] sm:$0xff]
    %v92 = vld [vmem:[#allocation6 + $0x10] sm:$0xff]
    %v93 = vld [vmem:[#allocation6 + $0x18] sm:$0xff]
    %v94 = vld [vmem:[#allocation6 + $0x20] sm:$0xff]
    %v95 = vld [vmem:[#allocation6 + $0x28] sm:$0xff]
    %v96 = vld [vmem:[#allocation6 + $0x30] sm:$0xff]
    %v97 = vld [vmem:[#allocation6 + $0x38] sm:$0xff]
    %v98 = vld [vmem:[#allocation6 + $0x40] sm:$0xff]
    %v99 = vld [vmem:[#allocation6 + $0x48] sm:$0xff]
    %v100 = vld [vmem:[#allocation6 + $0x50] sm:$0xff]
    %v101 = vld [vmem:[#allocation6 + $0x58] sm:$0xff]
    %v102 = vld [vmem:[#allocation6 + $0x60] sm:$0xff]
    %v103 = vld [vmem:[#allocation6 + $0x68] sm:$0xff]
    %v104 = vld [vmem:[#allocation6 + $0x70] sm:$0xff]
    %v105 = vld [vmem:[#allocation6 + $0x78] sm:$0xff]
    %v106 = vld [vmem:[#allocation6 + $0x80] sm:$0xff]
    %v107 = vld [vmem:[#allocation6 + $0x88] sm:$0xff]
    %v108 = vld [vmem:[#allocation6 + $0x90] sm:$0xff]
    %v109 = vld [vmem:[#allocation6 + $0x98] sm:$0xff]
    %v110 = vld [vmem:[#allocation6 + $0xa0] sm:$0xff]
    %v111 = vld [vmem:[#allocation6 + $0xa8] sm:$0xff]
    %v112 = vld [vmem:[#allocation6 + $0xb0] sm:$0xff]
    %v113 = vld [vmem:[#allocation6 + $0xb8] sm:$0xff]
    %v114 = vld [vmem:[#allocation6 + $0xc0] sm:$0xff]
    %v115 = vld [vmem:[#allocation6 + $0xc8] sm:$0xff]
    %v116 = vld [vmem:[#allocation6 + $0xd0] sm:$0xff]
    %v117 = vld [vmem:[#allocation6 + $0xd8] sm:$0xff]
    %v118 = vld [vmem:[#allocation6 + $0xe0] sm:$0xff]
    %v119 = vld [vmem:[#allocation6 + $0xe8] sm:$0xff]
    %v120 = vld [vmem:[#allocation6 + $0xf0] sm:$0xff]
    %v121 = vld [vmem:[#allocation6 + $0xf8] sm:$0xff]
    %v122 = vld [vmem:[#allocation6 + $0x100] sm:$0xff]
    %v123 = vld [vmem:[#allocation6 + $0x108] sm:$0xff]
    %v124 = vld [vmem:[#allocation6 + $0x110] sm:$0xff]
    %v125 = vld [vmem:[#allocation6 + $0x118] sm:$0xff]
    %v126 = vld [vmem:[#allocation6 + $0x120] sm:$0xff]
    %v127 = vld [vmem:[#allocation6 + $0x128] sm:$0xff]
    %v128 = vld [vmem:[#allocation6 + $0x130] sm:$0xff]
    %v129 = vld [vmem:[#allocation6 + $0x138] sm:$0xff]
    %v130 = vld [vmem:[#allocation6 + $0x140] sm:$0xff]
    %v131 = vld [vmem:[#allocation6 + $0x148] sm:$0xff]
    %v132 = vld [vmem:[#allocation6 + $0x150] sm:$0xff]
    %v133 = vld [vmem:[#allocation6 + $0x158] sm:$0xff]
    %v134 = vld [vmem:[#allocation6 + $0x160] sm:$0xff]
    %v135 = vld [vmem:[#allocation6 + $0x168] sm:$0xff]
    %v136 = vld [vmem:[#allocation6 + $0x170] sm:$0xff]
    %v137 = vld [vmem:[#allocation6 + $0x178] sm:$0xff]
    %s138 = sld [smem:[#allocation2]]
    %v139 = vstv %s138
    %v141 = vperm.slane %v89, 0
    %v142 = vperm.slane %v89, 1
    %v143 = vperm.slane %v89, 2
    %147 = vmatpush.msra.mxu0 %v105
    %148 = vmatpush.msra.mxu0 %v104
    %149 = vmatpush.msra.mxu0 %v103
    %150 = vmatpush.msra.mxu0 %v102
    %151 = vmatpush.msra.mxu0 %v101
    %152 = vmatpush.msra.mxu0 %v100
    %153 = vmatpush.msra.mxu0 %v99
    %154 = vmatpush.msra.mxu0 %v98
    %155 = vmatpush.msra.mxu0 %v97
    %156 = vmatpush.msra.mxu0 %v96
    %157 = vmatpush.msra.mxu0 %v95
    %158 = vmatpush.msra.mxu0 %v94
    %159 = vmatpush.msra.mxu0 %v93
    %160 = vmatpush.msra.mxu0 %v92
    %161 = vmatpush.msra.mxu0 %v91
    %162 = vmatpush.msra.mxu0 %v90
    %163 = vmatmul.f32.gmra.mxu0 %v141
    %v164 = vpop.f32.mrf.mxu0
    %v165 = vadd.f32 %v139, %v164
    %166 = vdwg.mxu0
    %167 = vmatpush.msra.mxu0 %v121
    %168 = vmatpush.msra.mxu0 %v120
    %169 = vmatpush.msra.mxu0 %v119
    %170 = vmatpush.msra.mxu0 %v118
    %171 = vmatpush.msra.mxu0 %v117
    %172 = vmatpush.msra.mxu0 %v116
    %173 = vmatpush.msra.mxu0 %v115
    %174 = vmatpush.msra.mxu0 %v114
    %175 = vmatpush.msra.mxu0 %v113
    %176 = vmatpush.msra.mxu0 %v112
    %177 = vmatpush.msra.mxu0 %v111
    %178 = vmatpush.msra.mxu0 %v110
    %179 = vmatpush.msra.mxu0 %v109
    %180 = vmatpush.msra.mxu0 %v108
    %181 = vmatpush.msra.mxu0 %v107
    %182 = vmatpush.msra.mxu0 %v106
    %183 = vmatmul.f32.gmra.mxu0 %v142
    %v184 = vpop.f32.mrf.mxu0
    %v185 = vadd.f32 %v165, %v184
    %186 = vdwg.mxu0
    %187 = vmatpush.msra.mxu0 %v137
    %188 = vmatpush.msra.mxu0 %v136
    %189 = vmatpush.msra.mxu0 %v135
    %190 = vmatpush.msra.mxu0 %v134
    %191 = vmatpush.msra.mxu0 %v133
    %192 = vmatpush.msra.mxu0 %v132
    %193 = vmatpush.msra.mxu0 %v131
    %194 = vmatpush.msra.mxu0 %v130
    %195 = vmatpush.msra.mxu0 %v129
    %196 = vmatpush.msra.mxu0 %v128
    %197 = vmatpush.msra.mxu0 %v127
    %198 = vmatpush.msra.mxu0 %v126
    %199 = vmatpush.msra.mxu0 %v125
    %200 = vmatpush.msra.mxu0 %v124
    %201 = vmatpush.msra.mxu0 %v123
    %202 = vmatpush.msra.mxu0 %v122
    %203 = vmatmul.f32.gmra.mxu0 %v143
    %v204 = vpop.f32.mrf.mxu0
    %v205 = vadd.f32 %v185, %v204
    %206 = vdwg.mxu0
    %v207 = vmax.f32 %v205, 0.0
    %v208 = vld [vmem:[#allocation8] sm:$0xff]
    %v209 = vld [vmem:[#allocation8 + $0x8] sm:$0xff]
    %v210 = vld [vmem:[#allocation8 + $0x10] sm:$0xff]
    %v211 = vld [vmem:[#allocation8 + $0x18] sm:$0xff]
    %v212 = vld [vmem:[#allocation8 + $0x20] sm:$0xff]
    %v213 = vld [vmem:[#allocation8 + $0x28] sm:$0xff]
    %v214 = vld [vmem:[#allocation8 + $0x30] sm:$0xff]
    %v215 = vld [vmem:[#allocation8 + $0x38] sm:$0xff]
    %v216 = vld [vmem:[#allocation8 + $0x40] sm:$0xff]
    %v217 = vld [vmem:[#allocation8 + $0x48] sm:$0xff]
    %v218 = vld [vmem:[#allocation8 + $0x50] sm:$0xff]
    %v219 = vld [vmem:[#allocation8 + $0x58] sm:$0xff]
    %v220 = vld [vmem:[#allocation8 + $0x60] sm:$0xff]
    %v221 = vld [vmem:[#allocation8 + $0x68] sm:$0xff]
    %v222 = vld [vmem:[#allocation8 + $0x70] sm:$0xff]
    %v223 = vld [vmem:[#allocation8 + $0x78] sm:$0xff]
    %v224 = vld [vmem:[%s4] sm:$0x1]
    %225 = vmatpush.msra.mxu0 %v223
    %226 = vmatpush.msra.mxu0 %v222
    %227 = vmatpush.msra.mxu0 %v221
    %228 = vmatpush.msra.mxu0 %v220
    %229 = vmatpush.msra.mxu0 %v219
    %230 = vmatpush.msra.mxu0 %v218
    %231 = vmatpush.msra.mxu0 %v217
    %232 = vmatpush.msra.mxu0 %v216
    %233 = vmatpush.msra.mxu0 %v215
    %234 = vmatpush.msra.mxu0 %v214
    %235 = vmatpush.msra.mxu0 %v213
    %236 = vmatpush.msra.mxu0 %v212
    %237 = vmatpush.msra.mxu0 %v211
    %238 = vmatpush.msra.mxu0 %v210
    %239 = vmatpush.msra.mxu0 %v209
    %240 = vmatpush.msra.mxu0 %v208
    %241 = vmatmul.f32.gmra.mxu0 %v207
    %v242 = vpop.f32.mrf.mxu0
    %v243 = vadd.f32 %v224, %v242
    %244 = vdwg.mxu0
    %v245 = vmax.f32 %v243, 0.0
    %v246 = vld [vmem:[#allocation9] sm:$0xff]
    %v247 = vld [vmem:[#allocation9 + $0x8] sm:$0xff]
    %v248 = vld [vmem:[#allocation9 + $0x10] sm:$0xff]
    %v249 = vld [vmem:[#allocation9 + $0x18] sm:$0xff]
    %v250 = vld [vmem:[#allocation9 + $0x20] sm:$0xff]
    %v251 = vld [vmem:[#allocation9 + $0x28] sm:$0xff]
    %v252 = vld [vmem:[#allocation9 + $0x30] sm:$0xff]
    %v253 = vld [vmem:[#allocation9 + $0x38] sm:$0xff]
    %v254 = vld [vmem:[#allocation9 + $0x40] sm:$0xff]
    %v255 = vld [vmem:[#allocation9 + $0x48] sm:$0xff]
    %v256 = vld [vmem:[#allocation9 + $0x50] sm:$0xff]
    %v257 = vld [vmem:[#allocation9 + $0x58] sm:$0xff]
    %v258 = vld [vmem:[#allocation9 + $0x60] sm:$0xff]
    %v259 = vld [vmem:[#allocation9 + $0x68] sm:$0xff]
    %v260 = vld [vmem:[#allocation9 + $0x70] sm:$0xff]
    %v261 = vld [vmem:[#allocation9 + $0x78] sm:$0xff]
    %v262 = vld [vmem:[%s6] sm:$0x1]
    %263 = vmatpush.msra.mxu0 %v261
    %264 = vmatpush.msra.mxu0 %v260
    %265 = vmatpush.msra.mxu0 %v259
    %266 = vmatpush.msra.mxu0 %v258
    %267 = vmatpush.msra.mxu0 %v257
    %268 = vmatpush.msra.mxu0 %v256
    %269 = vmatpush.msra.mxu0 %v255
    %270 = vmatpush.msra.mxu0 %v254
    %271 = vmatpush.msra.mxu0 %v253
    %272 = vmatpush.msra.mxu0 %v252
    %273 = vmatpush.msra.mxu0 %v251
    %274 = vmatpush.msra.mxu0 %v250
    %275 = vmatpush.msra.mxu0 %v249
    %276 = vmatpush.msra.mxu0 %v248
    %277 = vmatpush.msra.mxu0 %v247
    %278 = vmatpush.msra.mxu0 %v246
    %279 = vmatmul.f32.gmra.mxu0 %v245
    %v280 = vpop.f32.mrf.mxu0
    %v281 = vadd.f32 %v262, %v280
    %282 = vdwg.mxu0
    %283 = vst [vmem:[#allocation11] sm:$0x1] %v281
    // Predicated region
    $region46: #{tpu_custom_call.1} parent=1 // pred_check
      _
    $region47: #{tpu_custom_call.1} parent=1 // pred_check_branch
      %285 = sbr.rel (0) target = $region49
    $region48: #{tpu_custom_call.1} parent=1 // pred_region
      %287 = vsyncadd [#allocation5], 0
      %s289 = sshll.u32 [#allocation11], 4
      %s290 = int_to_ptr.vmem [resolvable:$true] %s289
      %s291 = sshll.u32 %s7, 4
      %s292 = int_to_ptr.hbm [resolvable:$true] %s291
      %294 = dma.vmem_to_hbm [thread:$0]  %s290, 16, %s292, [#allocation5]
    $region49: #{tpu_custom_call.1} parent=1 // pred_fallthru
      _
    // Predicated region
    $region50: #{tpu_custom_call.1} parent=1 // pred_check
      _
    $region51: #{tpu_custom_call.1} parent=1 // pred_check_branch
      %296 = sbr.rel (0) target = $region53
    $region52: #{tpu_custom_call.1} parent=1 // pred_region
      %298 = dma.done [#allocation5], 16
    $region53: #{tpu_custom_call.1} parent=1 // pred_fallthru
      _
    %299 = vsyncpa [#allocation4], 1
    %300 = vsyncpa [#allocation7], 1
    %301 = vsyncpa [#allocation10], 1
    %302 = vsyncpa [#allocation5], 1

</llo_original>
